<compile_context>
chip_gen: v7x
topology: tpu7x:2x2x1
jax: 0.10.0
libtpu: 0.0.40
codegen_flags: <defaults>
</compile_context>

<pallas_src>
import jax
import jax.numpy as jnp
import numpy as np
from jax.experimental import pallas as pl
from jax.experimental.pallas import tpu as pltpu


def _round_up(a: int, b: int) -> int:
    return (a + b - 1) // b * b


def _default_vmem_limit_bytes() -> int:
    """~75% of physical VMEM, capped at 96 MiB (48 MiB on v7x / unknown)."""
    try:
        cap = int(pltpu.get_tpu_info().vmem_capacity_bytes)
    except Exception:
        cap = 64 * 1024 * 1024
    return max(32 * 1024 * 1024, min(cap * 3 // 4, 96 * 1024 * 1024))


# --------------------------------------------------------------------------
# Kernel
# --------------------------------------------------------------------------
def _make_mlp_kernel(n_hid: int, compute_dtype, batch: int, tb: int):
    """Fused (Linear->ReLU)*n_hid -> Linear -> log_softmax -> argmax/gather."""
    mask_rows = (batch % tb) != 0
    n_params = 2 * (n_hid + 1)

    def kernel(x_ref, lab_ref, *refs):
        param_refs = refs[:n_params]
        pout_ref, pred_ref, gath_ref = refs[n_params:n_params + 3]

        x = x_ref[...]
        if mask_rows:
            # Zero out-of-range rows of the trailing partial tile so exp/log
            # never see stale-VMEM garbage (results of those rows are discarded).
            row = (jax.lax.broadcasted_iota(jnp.int32, x.shape, 0)
                   + pl.program_id(0) * tb)
            x = jnp.where(row < batch, x, 0.0)

        out = x.astype(compute_dtype)

        # Hidden stack: Linear -> ReLU (dropout == identity in eval mode).
        for i in range(n_hid):
            w = param_refs[2 * i][...]                      # (in_pad, hid_pad)
            b = param_refs[2 * i + 1][...]                  # (1, hid_pad), f32
            h = jnp.dot(out, w, preferred_element_type=jnp.float32) + b
            out = jnp.maximum(h, 0.0).astype(compute_dtype)

        # Output layer: padded to a lane-dense 128-multiple class axis.
        wo = param_refs[2 * n_hid][...]                     # (hid_pad, C_pad)
        bo = param_refs[2 * n_hid + 1][...]                 # (1, C_pad); pad cols -1e30
        logits = jnp.dot(out, wo, preferred_element_type=jnp.float32) + bo

        # log_softmax over dim=1 (padded cols carry -1e30 -> exp underflows to 0).
        m = jnp.max(logits, axis=1, keepdims=True)
        lse = m + jnp.log(jnp.sum(jnp.exp(logits - m), axis=1, keepdims=True))
        logp = logits - lse
        pout_ref[...] = logp.astype(pout_ref.dtype)

        # Fused argmax (first max index); padded columns can never win.
        c_pad = logp.shape[1]
        col = jax.lax.broadcasted_iota(jnp.int32, logp.shape, 1)
        maxv = jnp.max(logp, axis=1, keepdims=True)
        pred = jnp.min(jnp.where(logp == maxv, col, c_pad), axis=1, keepdims=True)
        pred_ref[...] = pred.astype(jnp.int32)

        # Fused label gather: logp[row, lab[row]] via one-hot mask.
        lab = lab_ref[...]                                  # (tb, 1) int32
        onehot = col == lab
        gath_ref[...] = jnp.sum(jnp.where(onehot, logp, 0.0),
                                axis=1, keepdims=True)

    return kernel


# --------------------------------------------------------------------------
# Parameter preparation (done ONCE, outside the per-step forward)
# --------------------------------------------------------------------------
def prepare_params(hidden_params, out_params, compute_dtype=jnp.bfloat16,
                   lane: int = 128):
    """Transpose weights to (in, out), zero-pad hidden dims to 128-lane multiples,
    pad the output layer to 128 classes (pad logits bias = -1e30).

    Weights stored in `compute_dtype` (bf16 default: MXU-native, halves HBM/VMEM
    traffic); biases stay f32 and are added to the f32 matmul accumulator.
    Zero padding is numerically exact (padded hidden units are exactly 0 after
    ReLU and multiply into zero weight rows downstream).
    """
    flat = []
    prev_pad = None  # padded width of the previous layer's output
    for w, b in hidden_params:
        w = jnp.asarray(w, jnp.float32)                     # (out, in)
        b = jnp.asarray(b, jnp.float32)
        out_dim, in_dim = w.shape
        in_pad = in_dim if prev_pad is None else prev_pad
        out_pad = _round_up(out_dim, lane)
        wt = jnp.zeros((in_pad, out_pad), jnp.float32).at[:in_dim, :out_dim].set(w.T)
        bp = jnp.zeros((1, out_pad), jnp.float32).at[0, :out_dim].set(b)
        flat.append(wt.astype(compute_dtype))
        flat.append(bp)
        prev_pad = out_pad

    w_o = jnp.asarray(out_params[0], jnp.float32)           # (C, hidden)
    b_o = jnp.asarray(out_params[1], jnp.float32)
    num_classes, hid = w_o.shape
    in_pad = hid if prev_pad is None else prev_pad
    c_pad = _round_up(num_classes, lane)
    wt = jnp.zeros((in_pad, c_pad), jnp.float32).at[:hid, :num_classes].set(w_o.T)
    bp = jnp.full((1, c_pad), -1e30, jnp.float32).at[0, :num_classes].set(b_o)
    flat.append(wt.astype(compute_dtype))
    flat.append(bp)
    return flat, num_classes


# --------------------------------------------------------------------------
# Forward wrapper
# --------------------------------------------------------------------------
def mlp_forward(x, lab, flat_params, num_classes, *,
                block_b=1024, vmem_limit_bytes=None):
    """Fused MLP forward. Returns [loss, err, pout (B,C), pred (B,) int32]."""
    batch, in_dim = x.shape
    n_hid = (len(flat_params) - 2) // 2
    c_pad = flat_params[-1].shape[-1]
    compute_dtype = flat_params[0].dtype  # activations follow the weight dtype

    # Batch tile: multiple of 8, capped by block_b, and <= cdiv(B,2) so the
    # parallel batch axis keeps >=2 grid steps (v7x has 2 TensorCores).
    tb = max(8, min(_round_up(block_b, 8),
                    _round_up(pl.cdiv(batch, 2), 8),
                    _round_up(batch, 8)))
    grid = (pl.cdiv(batch, tb),)

    lab_i32 = jnp.asarray(lab, jnp.int32)
    lab2d = lab_i32.reshape(batch, 1)

    if vmem_limit_bytes is None:
        vmem_limit_bytes = _default_vmem_limit_bytes()

    x_spec = pl.BlockSpec((tb, in_dim), lambda i: (i, 0))
    lab_spec = pl.BlockSpec((tb, 1), lambda i: (i, 0))
    pout_spec = pl.BlockSpec((tb, c_pad), lambda i: (i, 0))
    pred_spec = pl.BlockSpec((tb, 1), lambda i: (i, 0))
    gath_spec = pl.BlockSpec((tb, 1), lambda i: (i, 0))

    # Advisory cost estimate for the XLA scheduler.
    weight_flops = 2 * batch * sum(
        int(flat_params[2 * i].shape[0] * flat_params[2 * i].shape[1])
        for i in range(n_hid + 1))
    bytes_accessed = int(
        x.size * x.dtype.itemsize
        + lab2d.size * 4
        + sum(int(p.size * p.dtype.itemsize) for p in flat_params)
        + batch * c_pad * 4 + 2 * batch * 4)
    cost = pl.CostEstimate(flops=weight_flops,
                           transcendentals=int(batch * c_pad),
                           bytes_accessed=bytes_accessed)

    kernel = _make_mlp_kernel(n_hid, compute_dtype, batch, tb)
    out_shape = (jax.ShapeDtypeStruct((batch, c_pad), jnp.float32),
                 jax.ShapeDtypeStruct((batch, 1), jnp.int32),
                 jax.ShapeDtypeStruct((batch, 1), jnp.float32))

    def build(single_buffer_params):
        # Parameters: full-array blocks, constant index_map -> resident in VMEM.
        if single_buffer_params:
            # Single-buffer the residents (never re-fetched) to halve their VMEM use.
            param_specs = [pl.BlockSpec(p.shape, lambda i: (0, 0),
                                        pipeline_mode=pl.Buffered(1))
                           for p in flat_params]
        else:
            param_specs = [pl.BlockSpec(p.shape, lambda i: (0, 0))
                           for p in flat_params]
        return pl.pallas_call(
            kernel,
            out_shape=out_shape,
            grid_spec=pltpu.PrefetchScalarGridSpec(
                num_scalar_prefetch=0,
                grid=grid,
                in_specs=[x_spec, lab_spec] + param_specs,
                out_specs=[pout_spec, pred_spec, gath_spec],
            ),
            compiler_params=pltpu.CompilerParams(
                dimension_semantics=("parallel",),
                vmem_limit_bytes=int(vmem_limit_bytes),
            ),
            cost_estimate=cost,
        )

    try:
        pout_padded, pred2d, gath2d = build(True)(x, lab2d, *flat_params)
    except Exception:
        # Fallback: default double-buffered resident params (known-good config).
        pout_padded, pred2d, gath2d = build(False)(x, lab2d, *flat_params)

    # Tiny wrapper reductions on (B,) vectors only; pout is never read back.
    pred = pred2d[:, 0]
    err = jnp.sum((pred != lab_i32).astype(jnp.float32))
    loss = -jnp.mean(gath2d[:, 0])
    pout = pout_padded[:, :num_classes]
    return [loss, err, pout, pred]


# --------------------------------------------------------------------------
# Init matching MLP.__init__ and a pure-JAX reference
# --------------------------------------------------------------------------
def init_params(key, input_dim, hidden_dim, n_hid, num_classes):
    hidden_params = []
    curr_in = input_dim
    for _ in range(n_hid):
        key, sub = jax.random.split(key)
        bound = np.sqrt(0.01 / (curr_in + hidden_dim))
        w = jax.random.uniform(
            sub, (hidden_dim, curr_in), jnp.float32, minval=-bound, maxval=bound)
        b = jnp.zeros((hidden_dim,), jnp.float32)
        hidden_params.append((w, b))
        curr_in = hidden_dim
    # fco: explicitly zeros in __init__.
    w_o = jnp.zeros((num_classes, curr_in), jnp.float32)
    b_o = jnp.zeros((num_classes,), jnp.float32)
    return hidden_params, (w_o, b_o)


def _reference(x, lab, hidden_params, out_params):
    out = x
    for w, b in hidden_params:
        out = jnp.maximum(out @ w.T + b, 0.0)
    w_o, b_o = out_params
    logits = out @ w_o.T + b_o
    pout = jax.nn.log_softmax(logits, axis=1)
    pred = jnp.argmax(pout, axis=1)
    err = jnp.sum((pred != lab).astype(jnp.float32))
    loss = -jnp.mean(jnp.take_along_axis(pout, lab[:, None], axis=1))
    return loss, err, pout, pred


def _check_exact(got, ref):
    loss, err, pout, pred = got
    ref_loss, ref_err, ref_pout, ref_pred = ref
    np.testing.assert_allclose(np.asarray(loss), np.asarray(ref_loss), rtol=1e-5, atol=1e-5)
    np.testing.assert_allclose(np.asarray(err), np.asarray(ref_err), rtol=0, atol=0)
    np.testing.assert_allclose(np.asarray(pout), np.asarray(ref_pout), rtol=1e-5, atol=1e-5)
    np.testing.assert_array_equal(np.asarray(pred), np.asarray(ref_pred))


if __name__ == "__main__":
    B, INPUT_DIM, HIDDEN_DIM, N_HID, NUM_CLASSES = 8, 40, 32, 2, 10

    key = jax.random.PRNGKey(0)
    kx, kl, kp, kw, kb, kx2, kl2 = jax.random.split(key, 7)

    # ---- Case 1: spec init (zero output layer), f32 compute, exact check ----
    x = jax.random.normal(kx, (B, INPUT_DIM), jnp.float32)
    lab = jax.random.randint(kl, (B,), 0, NUM_CLASSES, jnp.int32)
    hidden_params, out_params = init_params(kp, INPUT_DIM, HIDDEN_DIM, N_HID, NUM_CLASSES)
    flat_f32, _ = prepare_params(hidden_params, out_params, compute_dtype=jnp.float32)

    got = mlp_forward(x, lab, flat_f32, NUM_CLASSES)
    jax.block_until_ready(got)
    _check_exact(got, _reference(x, lab, hidden_params, out_params))

    # ---- Case 2: non-zero output layer + remainder batch tiles, f32 ----
    B2 = 13
    x2 = jax.random.normal(kx2, (B2, INPUT_DIM), jnp.float32)
    lab2 = jax.random.randint(kl2, (B2,), 0, NUM_CLASSES, jnp.int32)
    out_params2 = (
        0.1 * jax.random.normal(kw, (NUM_CLASSES, HIDDEN_DIM), jnp.float32),
        0.1 * jax.random.normal(kb, (NUM_CLASSES,), jnp.float32),
    )
    flat2_f32, _ = prepare_params(hidden_params, out_params2, compute_dtype=jnp.float32)

    got2 = mlp_forward(x2, lab2, flat2_f32, NUM_CLASSES, block_b=8)
    jax.block_until_ready(got2)
    _check_exact(got2, _reference(x2, lab2, hidden_params, out_params2))

    # ---- Case 3: default bf16 compute path (loose tolerance) ----
    flat2_bf16, _ = prepare_params(hidden_params, out_params2)  # bf16 default
    got3 = mlp_forward(x2, lab2, flat2_bf16, NUM_CLASSES)
    jax.block_until_ready(got3)
    ref3 = _reference(x2, lab2, hidden_params, out_params2)
    np.testing.assert_allclose(np.asarray(got3[0]), np.asarray(ref3[0]), rtol=5e-2, atol=5e-2)
    np.testing.assert_allclose(np.asarray(got3[2]), np.asarray(ref3[2]), rtol=5e-2, atol=5e-2)
    assert np.all(np.isfinite(np.asarray(got3[2])))

    print("KERNEL_OK")
</pallas_src>

<mosaic_0001>
module attributes {stable_mosaic.version = 11 : i64} {
  func.func @kernel(%arg0: i32, %arg1: memref<8x40xf32, #tpu.memory_space<vmem>>, %arg2: memref<8x1xi32, #tpu.memory_space<vmem>>, %arg3: memref<40x128xf32, #tpu.memory_space<vmem>>, %arg4: memref<1x128xf32, #tpu.memory_space<vmem>>, %arg5: memref<128x128xf32, #tpu.memory_space<vmem>>, %arg6: memref<1x128xf32, #tpu.memory_space<vmem>>, %arg7: memref<128x128xf32, #tpu.memory_space<vmem>>, %arg8: memref<1x128xf32, #tpu.memory_space<vmem>>, %arg9: memref<8x128xf32, #tpu.memory_space<vmem>>, %arg10: memref<8x1xi32, #tpu.memory_space<vmem>>, %arg11: memref<8x1xf32, #tpu.memory_space<vmem>>) attributes {dimension_semantics = [#tpu.dimension_semantics<parallel>], iteration_bounds = array<i64: 1>, scalar_prefetch = 0 : i64, scratch_operands = 0 : i64, tpu.core_type = #tpu.core_type<tc>, window_params = [{transform_indices = @transform_0, window_bounds = array<i64: 8, 40>}, {transform_indices = @transform_1, window_bounds = array<i64: 8, 1>}, {pipeline_mode = #tpu.pipeline_mode<synchronous>, transform_indices = @transform_2, window_bounds = array<i64: 40, 128>}, {pipeline_mode = #tpu.pipeline_mode<synchronous>, transform_indices = @transform_3, window_bounds = array<i64: 1, 128>}, {pipeline_mode = #tpu.pipeline_mode<synchronous>, transform_indices = @transform_4, window_bounds = array<i64: 128, 128>}, {pipeline_mode = #tpu.pipeline_mode<synchronous>, transform_indices = @transform_5, window_bounds = array<i64: 1, 128>}, {pipeline_mode = #tpu.pipeline_mode<synchronous>, transform_indices = @transform_6, window_bounds = array<i64: 128, 128>}, {pipeline_mode = #tpu.pipeline_mode<synchronous>, transform_indices = @transform_7, window_bounds = array<i64: 1, 128>}, {transform_indices = @transform_8, window_bounds = array<i64: 8, 128>}, {transform_indices = @transform_9, window_bounds = array<i64: 8, 1>}, {transform_indices = @transform_10, window_bounds = array<i64: 8, 1>}]} {
    %c0 = arith.constant 0 : index
    %c0_0 = arith.constant 0 : index
    %0 = vector.load %arg1[%c0, %c0_0] : memref<8x40xf32, #tpu.memory_space<vmem>>, vector<8x40xf32>
    %c0_1 = arith.constant 0 : index
    %c0_2 = arith.constant 0 : index
    %1 = vector.load %arg3[%c0_1, %c0_2] : memref<40x128xf32, #tpu.memory_space<vmem>>, vector<40x128xf32>
    %c0_3 = arith.constant 0 : index
    %c0_4 = arith.constant 0 : index
    %2 = vector.load %arg4[%c0_3, %c0_4] : memref<1x128xf32, #tpu.memory_space<vmem>>, vector<1x128xf32>
    %cst = arith.constant dense<0.000000e+00> : vector<8x128xf32>
    %3 = tpu.matmul %0, %1, %cst {dimension_numbers = #tpu.dot_dimension_numbers<[1], [0], [0], [1], [0, 0, 1, 1], [], []>} : vector<8x40xf32>, vector<40x128xf32>, vector<8x128xf32> -> vector<8x128xf32>
    %4 = vector.broadcast %2 : vector<1x128xf32> to vector<8x128xf32>
    %5 = arith.addf %3, %4 : vector<8x128xf32>
    %cst_5 = arith.constant 0.000000e+00 : f32
    %6 = vector.broadcast %cst_5 : f32 to vector<8x128xf32>
    %7 = arith.maximumf %5, %6 : vector<8x128xf32>
    %c0_6 = arith.constant 0 : index
    %c0_7 = arith.constant 0 : index
    %8 = vector.load %arg5[%c0_6, %c0_7] : memref<128x128xf32, #tpu.memory_space<vmem>>, vector<128x128xf32>
    %c0_8 = arith.constant 0 : index
    %c0_9 = arith.constant 0 : index
    %9 = vector.load %arg6[%c0_8, %c0_9] : memref<1x128xf32, #tpu.memory_space<vmem>>, vector<1x128xf32>
    %cst_10 = arith.constant dense<0.000000e+00> : vector<8x128xf32>
    %10 = tpu.matmul %7, %8, %cst_10 {dimension_numbers = #tpu.dot_dimension_numbers<[1], [0], [0], [1], [0, 0, 1, 1], [], []>} : vector<8x128xf32>, vector<128x128xf32>, vector<8x128xf32> -> vector<8x128xf32>
    %11 = vector.broadcast %9 : vector<1x128xf32> to vector<8x128xf32>
    %12 = arith.addf %10, %11 : vector<8x128xf32>
    %cst_11 = arith.constant 0.000000e+00 : f32
    %13 = vector.broadcast %cst_11 : f32 to vector<8x128xf32>
    %14 = arith.maximumf %12, %13 : vector<8x128xf32>
    %c0_12 = arith.constant 0 : index
    %c0_13 = arith.constant 0 : index
    %15 = vector.load %arg7[%c0_12, %c0_13] : memref<128x128xf32, #tpu.memory_space<vmem>>, vector<128x128xf32>
    %c0_14 = arith.constant 0 : index
    %c0_15 = arith.constant 0 : index
    %16 = vector.load %arg8[%c0_14, %c0_15] : memref<1x128xf32, #tpu.memory_space<vmem>>, vector<1x128xf32>
    %cst_16 = arith.constant dense<0.000000e+00> : vector<8x128xf32>
    %17 = tpu.matmul %14, %15, %cst_16 {dimension_numbers = #tpu.dot_dimension_numbers<[1], [0], [0], [1], [0, 0, 1, 1], [], []>} : vector<8x128xf32>, vector<128x128xf32>, vector<8x128xf32> -> vector<8x128xf32>
    %18 = vector.broadcast %16 : vector<1x128xf32> to vector<8x128xf32>
    %19 = arith.addf %17, %18 : vector<8x128xf32>
    %cst_17 = arith.constant dense<0xFF800000> : vector<8xf32>
    %20 = vector.multi_reduction <maximumf>, %19, %cst_17 [1] : vector<8x128xf32> to vector<8xf32>
    %21 = vector.shape_cast %20 : vector<8xf32> to vector<8x1xf32>
    %22 = vector.broadcast %21 : vector<8x1xf32> to vector<8x128xf32>
    %23 = arith.subf %19, %22 : vector<8x128xf32>
    %24 = math.exp %23 : vector<8x128xf32>
    %cst_18 = arith.constant dense<0.000000e+00> : vector<8xf32>
    %25 = vector.multi_reduction <add>, %24, %cst_18 [1] : vector<8x128xf32> to vector<8xf32>
    %26 = vector.shape_cast %25 : vector<8xf32> to vector<8x1xf32>
    %27 = math.log %26 : vector<8x1xf32>
    %28 = arith.addf %21, %27 : vector<8x1xf32>
    %29 = vector.broadcast %28 : vector<8x1xf32> to vector<8x128xf32>
    %30 = arith.subf %19, %29 : vector<8x128xf32>
    %c0_19 = arith.constant 0 : index
    %c0_20 = arith.constant 0 : index
    %31 = vector.load %arg9[%c0_19, %c0_20] : memref<8x128xf32, #tpu.memory_space<vmem>>, vector<8x128xf32>
    tpu.vector_store %arg9[%c0_19, %c0_20], %30 {strides = array<i32>} : memref<8x128xf32, #tpu.memory_space<vmem>>, vector<8x128xf32>,
    %32 = tpu.iota {dimensions = array<i32: 1>} : vector<8x128xi32>
    %cst_21 = arith.constant dense<0xFF800000> : vector<8xf32>
    %33 = vector.multi_reduction <maximumf>, %30, %cst_21 [1] : vector<8x128xf32> to vector<8xf32>
    %34 = vector.shape_cast %33 : vector<8xf32> to vector<8x1xf32>
    %35 = vector.broadcast %34 : vector<8x1xf32> to vector<8x128xf32>
    %36 = arith.cmpf oeq, %30, %35 : vector<8x128xf32>
    %c128_i32 = arith.constant 128 : i32
    %37 = vector.broadcast %c128_i32 : i32 to vector<8x128xi32>
    %38 = arith.select %36, %32, %37 : vector<8x128xi1>, vector<8x128xi32>
    %cst_22 = arith.constant dense<2147483647> : vector<8xi32>
    %39 = vector.multi_reduction <minsi>, %38, %cst_22 [1] : vector<8x128xi32> to vector<8xi32>
    %40 = vector.shape_cast %39 : vector<8xi32> to vector<8x1xi32>
    %c0_23 = arith.constant 0 : index
    %c0_24 = arith.constant 0 : index
    %41 = vector.load %arg10[%c0_23, %c0_24] : memref<8x1xi32, #tpu.memory_space<vmem>>, vector<8x1xi32>
    tpu.vector_store %arg10[%c0_23, %c0_24], %40 {strides = array<i32>} : memref<8x1xi32, #tpu.memory_space<vmem>>, vector<8x1xi32>,
    %c0_25 = arith.constant 0 : index
    %c0_26 = arith.constant 0 : index
    %42 = vector.load %arg2[%c0_25, %c0_26] : memref<8x1xi32, #tpu.memory_space<vmem>>, vector<8x1xi32>
    %43 = vector.broadcast %42 : vector<8x1xi32> to vector<8x128xi32>
    %44 = arith.cmpi eq, %32, %43 : vector<8x128xi32>
    %cst_27 = arith.constant 0.000000e+00 : f32
    %45 = vector.broadcast %cst_27 : f32 to vector<8x128xf32>
    %46 = arith.select %44, %30, %45 : vector<8x128xi1>, vector<8x128xf32>
    %cst_28 = arith.constant dense<0.000000e+00> : vector<8xf32>
    %47 = vector.multi_reduction <add>, %46, %cst_28 [1] : vector<8x128xf32> to vector<8xf32>
    %48 = vector.shape_cast %47 : vector<8xf32> to vector<8x1xf32>
    %c0_29 = arith.constant 0 : index
    %c0_30 = arith.constant 0 : index
    %49 = vector.load %arg11[%c0_29, %c0_30] : memref<8x1xf32, #tpu.memory_space<vmem>>, vector<8x1xf32>
    tpu.vector_store %arg11[%c0_29, %c0_30], %48 {strides = array<i32>} : memref<8x1xf32, #tpu.memory_space<vmem>>, vector<8x1xf32>,
    return
  }
  func.func @transform_0(%arg0: i32) -> (i32, i32) {
    %c0_i32 = arith.constant 0 : i32
    %c0_i32_0 = arith.constant 0 : i32
    return %arg0, %c0_i32 : i32, i32
  }
  func.func @transform_1(%arg0: i32) -> (i32, i32) {
    %c0_i32 = arith.constant 0 : i32
    %c0_i32_0 = arith.constant 0 : i32
    return %arg0, %c0_i32 : i32, i32
  }
  func.func @transform_2(%arg0: i32) -> (i32, i32) {
    %c0_i32 = arith.constant 0 : i32
    %c0_i32_0 = arith.constant 0 : i32
    %c0_i32_1 = arith.constant 0 : i32
    return %c0_i32, %c0_i32_0 : i32, i32
  }
  func.func @transform_3(%arg0: i32) -> (i32, i32) {
    %c0_i32 = arith.constant 0 : i32
    %c0_i32_0 = arith.constant 0 : i32
    %c0_i32_1 = arith.constant 0 : i32
    return %c0_i32, %c0_i32_0 : i32, i32
  }
  func.func @transform_4(%arg0: i32) -> (i32, i32) {
    %c0_i32 = arith.constant 0 : i32
    %c0_i32_0 = arith.constant 0 : i32
    %c0_i32_1 = arith.constant 0 : i32
    return %c0_i32, %c0_i32_0 : i32, i32
  }
  func.func @transform_5(%arg0: i32) -> (i32, i32) {
    %c0_i32 = arith.constant 0 : i32
    %c0_i32_0 = arith.constant 0 : i32
    %c0_i32_1 = arith.constant 0 : i32
    return %c0_i32, %c0_i32_0 : i32, i32
  }
  func.func @transform_6(%arg0: i32) -> (i32, i32) {
    %c0_i32 = arith.constant 0 : i32
    %c0_i32_0 = arith.constant 0 : i32
    %c0_i32_1 = arith.constant 0 : i32
    return %c0_i32, %c0_i32_0 : i32, i32
  }
  func.func @transform_7(%arg0: i32) -> (i32, i32) {
    %c0_i32 = arith.constant 0 : i32
    %c0_i32_0 = arith.constant 0 : i32
    %c0_i32_1 = arith.constant 0 : i32
    return %c0_i32, %c0_i32_0 : i32, i32
  }
  func.func @transform_8(%arg0: i32) -> (i32, i32) {
    %c0_i32 = arith.constant 0 : i32
    %c0_i32_0 = arith.constant 0 : i32
    return %arg0, %c0_i32 : i32, i32
  }
  func.func @transform_9(%arg0: i32) -> (i32, i32) {
    %c0_i32 = arith.constant 0 : i32
    %c0_i32_0 = arith.constant 0 : i32
    return %arg0, %c0_i32 : i32, i32
  }
  func.func @transform_10(%arg0: i32) -> (i32, i32) {
    %c0_i32 = arith.constant 0 : i32
    %c0_i32_0 = arith.constant 0 : i32
    return %arg0, %c0_i32 : i32, i32
  }
}

module attributes {stable_mosaic.version = 11 : i64} {
  func.func @kernel(%arg0: i32, %arg1: memref<8x40xf32, #tpu.memory_space<vmem>>, %arg2: memref<8x1xi32, #tpu.memory_space<vmem>>, %arg3: memref<40x128xf32, #tpu.memory_space<vmem>>, %arg4: memref<1x128xf32, #tpu.memory_space<vmem>>, %arg5: memref<128x128xf32, #tpu.memory_space<vmem>>, %arg6: memref<1x128xf32, #tpu.memory_space<vmem>>, %arg7: memref<128x128xf32, #tpu.memory_space<vmem>>, %arg8: memref<1x128xf32, #tpu.memory_space<vmem>>, %arg9: memref<8x128xf32, #tpu.memory_space<vmem>>, %arg10: memref<8x1xi32, #tpu.memory_space<vmem>>, %arg11: memref<8x1xf32, #tpu.memory_space<vmem>>) attributes {dimension_semantics = [#tpu.dimension_semantics<parallel>], iteration_bounds = array<i64: 1>, scalar_prefetch = 0 : i64, scratch_operands = 0 : i64, tpu.core_type = #tpu.core_type<tc>, window_params = [{transform_indices = @transform_0, window_bounds = array<i64: 8, 40>}, {transform_indices = @transform_1, window_bounds = array<i64: 8, 1>}, {pipeline_mode = #tpu.pipeline_mode<synchronous>, transform_indices = @transform_2, window_bounds = array<i64: 40, 128>}, {pipeline_mode = #tpu.pipeline_mode<synchronous>, transform_indices = @transform_3, window_bounds = array<i64: 1, 128>}, {pipeline_mode = #tpu.pipeline_mode<synchronous>, transform_indices = @transform_4, window_bounds = array<i64: 128, 128>}, {pipeline_mode = #tpu.pipeline_mode<synchronous>, transform_indices = @transform_5, window_bounds = array<i64: 1, 128>}, {pipeline_mode = #tpu.pipeline_mode<synchronous>, transform_indices = @transform_6, window_bounds = array<i64: 128, 128>}, {pipeline_mode = #tpu.pipeline_mode<synchronous>, transform_indices = @transform_7, window_bounds = array<i64: 1, 128>}, {transform_indices = @transform_8, window_bounds = array<i64: 8, 128>}, {transform_indices = @transform_9, window_bounds = array<i64: 8, 1>}, {transform_indices = @transform_10, window_bounds = array<i64: 8, 1>}]} {
    %c0 = arith.constant 0 : index
    %c0_0 = arith.constant 0 : index
    %0 = vector.load %arg1[%c0, %c0_0] : memref<8x40xf32, #tpu.memory_space<vmem>>, vector<8x40xf32>
    %c0_1 = arith.constant 0 : index
    %c0_2 = arith.constant 0 : index
    %1 = vector.load %arg3[%c0_1, %c0_2] : memref<40x128xf32, #tpu.memory_space<vmem>>, vector<40x128xf32>
    %c0_3 = arith.constant 0 : index
    %c0_4 = arith.constant 0 : index
    %2 = vector.load %arg4[%c0_3, %c0_4] : memref<1x128xf32, #tpu.memory_space<vmem>>, vector<1x128xf32>
    %cst = arith.constant dense<0.000000e+00> : vector<8x128xf32>
    %3 = tpu.matmul %0, %1, %cst {dimension_numbers = #tpu.dot_dimension_numbers<[1], [0], [0], [1], [0, 0, 1, 1], [], []>} : vector<8x40xf32>, vector<40x128xf32>, vector<8x128xf32> -> vector<8x128xf32>
    %4 = vector.broadcast %2 : vector<1x128xf32> to vector<8x128xf32>
    %5 = arith.addf %3, %4 : vector<8x128xf32>
    %cst_5 = arith.constant 0.000000e+00 : f32
    %6 = vector.broadcast %cst_5 : f32 to vector<8x128xf32>
    %7 = arith.maximumf %5, %6 : vector<8x128xf32>
    %c0_6 = arith.constant 0 : index
    %c0_7 = arith.constant 0 : index
    %8 = vector.load %arg5[%c0_6, %c0_7] : memref<128x128xf32, #tpu.memory_space<vmem>>, vector<128x128xf32>
    %c0_8 = arith.constant 0 : index
    %c0_9 = arith.constant 0 : index
    %9 = vector.load %arg6[%c0_8, %c0_9] : memref<1x128xf32, #tpu.memory_space<vmem>>, vector<1x128xf32>
    %cst_10 = arith.constant dense<0.000000e+00> : vector<8x128xf32>
    %10 = tpu.matmul %7, %8, %cst_10 {dimension_numbers = #tpu.dot_dimension_numbers<[1], [0], [0], [1], [0, 0, 1, 1], [], []>} : vector<8x128xf32>, vector<128x128xf32>, vector<8x128xf32> -> vector<8x128xf32>
    %11 = vector.broadcast %9 : vector<1x128xf32> to vector<8x128xf32>
    %12 = arith.addf %10, %11 : vector<8x128xf32>
    %cst_11 = arith.constant 0.000000e+00 : f32
    %13 = vector.broadcast %cst_11 : f32 to vector<8x128xf32>
    %14 = arith.maximumf %12, %13 : vector<8x128xf32>
    %c0_12 = arith.constant 0 : index
    %c0_13 = arith.constant 0 : index
    %15 = vector.load %arg7[%c0_12, %c0_13] : memref<128x128xf32, #tpu.memory_space<vmem>>, vector<128x128xf32>
    %c0_14 = arith.constant 0 : index
    %c0_15 = arith.constant 0 : index
    %16 = vector.load %arg8[%c0_14, %c0_15] : memref<1x128xf32, #tpu.memory_space<vmem>>, vector<1x128xf32>
    %cst_16 = arith.constant dense<0.000000e+00> : vector<8x128xf32>
    %17 = tpu.matmul %14, %15, %cst_16 {dimension_numbers = #tpu.dot_dimension_numbers<[1], [0], [0], [1], [0, 0, 1, 1], [], []>} : vector<8x128xf32>, vector<128x128xf32>, vector<8x128xf32> -> vector<8x128xf32>
    %18 = vector.broadcast %16 : vector<1x128xf32> to vector<8x128xf32>
    %19 = arith.addf %17, %18 : vector<8x128xf32>
    %cst_17 = arith.constant dense<0xFF800000> : vector<8xf32>
    %20 = vector.multi_reduction <maximumf>, %19, %cst_17 [1] : vector<8x128xf32> to vector<8xf32>
    %21 = vector.shape_cast %20 : vector<8xf32> to vector<8x1xf32>
    %22 = vector.broadcast %21 : vector<8x1xf32> to vector<8x128xf32>
    %23 = arith.subf %19, %22 : vector<8x128xf32>
    %24 = math.exp %23 : vector<8x128xf32>
    %cst_18 = arith.constant dense<0.000000e+00> : vector<8xf32>
    %25 = vector.multi_reduction <add>, %24, %cst_18 [1] : vector<8x128xf32> to vector<8xf32>
    %26 = vector.shape_cast %25 : vector<8xf32> to vector<8x1xf32>
    %27 = math.log %26 : vector<8x1xf32>
    %28 = arith.addf %21, %27 : vector<8x1xf32>
    %29 = vector.broadcast %28 : vector<8x1xf32> to vector<8x128xf32>
    %30 = arith.subf %19, %29 : vector<8x128xf32>
    %c0_19 = arith.constant 0 : index
    %c0_20 = arith.constant 0 : index
    %31 = vector.load %arg9[%c0_19, %c0_20] : memref<8x128xf32, #tpu.memory_space<vmem>>, vector<8x128xf32>
    tpu.vector_store %arg9[%c0_19, %c0_20], %30 {strides = array<i32>} : memref<8x128xf32, #tpu.memory_space<vmem>>, vector<8x128xf32>,
    %32 = tpu.iota {dimensions = array<i32: 1>} : vector<8x128xi32>
    %cst_21 = arith.constant dense<0xFF800000> : vector<8xf32>
    %33 = vector.multi_reduction <maximumf>, %30, %cst_21 [1] : vector<8x128xf32> to vector<8xf32>
    %34 = vector.shape_cast %33 : vector<8xf32> to vector<8x1xf32>
    %35 = vector.broadcast %34 : vector<8x1xf32> to vector<8x128xf32>
    %36 = arith.cmpf oeq, %30, %35 : vector<8x128xf32>
    %c128_i32 = arith.constant 128 : i32
    %37 = vector.broadcast %c128_i32 : i32 to vector<8x128xi32>
    %38 = arith.select %36, %32, %37 : vector<8x128xi1>, vector<8x128xi32>
    %cst_22 = arith.constant dense<2147483647> : vector<8xi32>
    %39 = vector.multi_reduction <minsi>, %38, %cst_22 [1] : vector<8x128xi32> to vector<8xi32>
    %40 = vector.shape_cast %39 : vector<8xi32> to vector<8x1xi32>
    %c0_23 = arith.constant 0 : index
    %c0_24 = arith.constant 0 : index
    %41 = vector.load %arg10[%c0_23, %c0_24] : memref<8x1xi32, #tpu.memory_space<vmem>>, vector<8x1xi32>
    tpu.vector_store %arg10[%c0_23, %c0_24], %40 {strides = array<i32>} : memref<8x1xi32, #tpu.memory_space<vmem>>, vector<8x1xi32>,
    %c0_25 = arith.constant 0 : index
    %c0_26 = arith.constant 0 : index
    %42 = vector.load %arg2[%c0_25, %c0_26] : memref<8x1xi32, #tpu.memory_space<vmem>>, vector<8x1xi32>
    %43 = vector.broadcast %42 : vector<8x1xi32> to vector<8x128xi32>
    %44 = arith.cmpi eq, %32, %43 : vector<8x128xi32>
    %cst_27 = arith.constant 0.000000e+00 : f32
    %45 = vector.broadcast %cst_27 : f32 to vector<8x128xf32>
    %46 = arith.select %44, %30, %45 : vector<8x128xi1>, vector<8x128xf32>
    %cst_28 = arith.constant dense<0.000000e+00> : vector<8xf32>
    %47 = vector.multi_reduction <add>, %46, %cst_28 [1] : vector<8x128xf32> to vector<8xf32>
    %48 = vector.shape_cast %47 : vector<8xf32> to vector<8x1xf32>
    %c0_29 = arith.constant 0 : index
    %c0_30 = arith.constant 0 : index
    %49 = vector.load %arg11[%c0_29, %c0_30] : memref<8x1xf32, #tpu.memory_space<vmem>>, vector<8x1xf32>
    tpu.vector_store %arg11[%c0_29, %c0_30], %48 {strides = array<i32>} : memref<8x1xf32, #tpu.memory_space<vmem>>, vector<8x1xf32>,
    return
  }
  func.func @transform_0(%arg0: i32) -> (i32, i32) {
    %c0_i32 = arith.constant 0 : i32
    %c0_i32_0 = arith.constant 0 : i32
    return %arg0, %c0_i32 : i32, i32
  }
  func.func @transform_1(%arg0: i32) -> (i32, i32) {
    %c0_i32 = arith.constant 0 : i32
    %c0_i32_0 = arith.constant 0 : i32
    return %arg0, %c0_i32 : i32, i32
  }
  func.func @transform_2(%arg0: i32) -> (i32, i32) {
    %c0_i32 = arith.constant 0 : i32
    %c0_i32_0 = arith.constant 0 : i32
    %c0_i32_1 = arith.constant 0 : i32
    return %c0_i32, %c0_i32_0 : i32, i32
  }
  func.func @transform_3(%arg0: i32) -> (i32, i32) {
    %c0_i32 = arith.constant 0 : i32
    %c0_i32_0 = arith.constant 0 : i32
    %c0_i32_1 = arith.constant 0 : i32
    return %c0_i32, %c0_i32_0 : i32, i32
  }
  func.func @transform_4(%arg0: i32) -> (i32, i32) {
    %c0_i32 = arith.constant 0 : i32
    %c0_i32_0 = arith.constant 0 : i32
    %c0_i32_1 = arith.constant 0 : i32
    return %c0_i32, %c0_i32_0 : i32, i32
  }
  func.func @transform_5(%arg0: i32) -> (i32, i32) {
    %c0_i32 = arith.constant 0 : i32
    %c0_i32_0 = arith.constant 0 : i32
    %c0_i32_1 = arith.constant 0 : i32
    return %c0_i32, %c0_i32_0 : i32, i32
  }
  func.func @transform_6(%arg0: i32) -> (i32, i32) {
    %c0_i32 = arith.constant 0 : i32
    %c0_i32_0 = arith.constant 0 : i32
    %c0_i32_1 = arith.constant 0 : i32
    return %c0_i32, %c0_i32_0 : i32, i32
  }
  func.func @transform_7(%arg0: i32) -> (i32, i32) {
    %c0_i32 = arith.constant 0 : i32
    %c0_i32_0 = arith.constant 0 : i32
    %c0_i32_1 = arith.constant 0 : i32
    return %c0_i32, %c0_i32_0 : i32, i32
  }
  func.func @transform_8(%arg0: i32) -> (i32, i32) {
    %c0_i32 = arith.constant 0 : i32
    %c0_i32_0 = arith.constant 0 : i32
    return %arg0, %c0_i32 : i32, i32
  }
  func.func @transform_9(%arg0: i32) -> (i32, i32) {
    %c0_i32 = arith.constant 0 : i32
    %c0_i32_0 = arith.constant 0 : i32
    return %arg0, %c0_i32 : i32, i32
  }
  func.func @transform_10(%arg0: i32) -> (i32, i32) {
    %c0_i32 = arith.constant 0 : i32
    %c0_i32_0 = arith.constant 0 : i32
    return %arg0, %c0_i32 : i32, i32
  }
}

</mosaic_0001>

<llo_original>
// kernel: tpu_custom_call.1
$region0: #{tpu_custom_call.1}
  #allocation0 [shape = 'u32[]', space=smem, size = 0x4, offset = 0x4, fixed_abs, tag = 'smem constant byte address 0x4 - core index']
  #allocation1 [shape = 'u32[144,128]{1,0:T(1,128)}', space=vmem, size = 0x12000, scoped, tag = 'internal scratch']
  %s0 = inlined_call_operand.vmem [shape: f32[8,40], index: 0, kind: input, shape index: {}]
  %s1 = inlined_call_operand.vmem [shape: s32[8,1], index: 1, kind: input, shape index: {}]
  %s2 = inlined_call_operand.hbm [shape: f32[40,128], index: 2, kind: input, shape index: {}]
  %s3 = inlined_call_operand.vmem [shape: f32[1,128], index: 3, kind: input, shape index: {}]
  %s4 = inlined_call_operand.hbm [shape: f32[128,128], index: 4, kind: input, shape index: {}]
  %s5 = inlined_call_operand.vmem [shape: f32[1,128], index: 5, kind: input, shape index: {}]
  %s6 = inlined_call_operand.hbm [shape: f32[128,128], index: 6, kind: input, shape index: {}]
  %s7 = inlined_call_operand.vmem [shape: f32[1,128], index: 7, kind: input, shape index: {}]
  %s8 = inlined_call_operand.hbm [shape: f32[8,128], index: 8, kind: output, shape index: {0}]
  %s9 = inlined_call_operand.vmem [shape: s32[8,1], index: 9, kind: output, shape index: {1}]
  %s10 = inlined_call_operand.vmem [shape: f32[8,1], index: 10, kind: output, shape index: {2}]
  %11 = xla_tuple %s8, %s9, %s10
  %s12 = sld [smem:[#allocation0]]
  $region70: #{tpu_custom_call.1} parent=0
    _
  %s14 = ssub.s32 1, %s12
  %s15 = scalar_select 0, %s14, %s12
  $region1: #{tpu_custom_call.1} parent=0
    #allocation2 [shape = 'u8[20480]{0}', space=vmem, size = 0x5000, scoped, tag = 'input window, operand 2, single buffered']
    #allocation3 [shape = 's32[1]{0}', space=sflag, size = 0x4, scoped, tag = 'scoped memory for tpu_custom_call.1']
    #allocation4 [shape = 's32[1]{0}', space=sflag, size = 0x4, scoped, tag = 'scoped memory for tpu_custom_call.1']
    #allocation5 [shape = 'u8[65536]{0}', space=vmem, size = 0x10000, scoped, tag = 'input window, operand 4, single buffered']
    #allocation6 [shape = 's32[1]{0}', space=sflag, size = 0x4, scoped, tag = 'scoped memory for tpu_custom_call.1']
    #allocation7 [shape = 'u8[65536]{0}', space=vmem, size = 0x10000, scoped, tag = 'input window, operand 6, single buffered']
    #allocation8 [shape = 'u8[4096]{0}', space=vmem, size = 0x1000, scoped, tag = 'output window, operand 0, single buffered']
    %16 = vsyncpa [#allocation3], 0
    %17 = vsyncpa [#allocation6], 0
    %18 = vsyncpa [#allocation4], 0
    // Predicated region
    $region2: #{tpu_custom_call.1} parent=1 // pred_check
      _
    $region3: #{tpu_custom_call.1} parent=1 // pred_check_branch
      %20 = sbr.rel (0) target = $region5
    $region4: #{tpu_custom_call.1} parent=1 // pred_region
      _
    $region5: #{tpu_custom_call.1} parent=1 // pred_fallthru
      _
    // Predicated region
    $region6: #{tpu_custom_call.1} parent=1 // pred_check
      _
    $region7: #{tpu_custom_call.1} parent=1 // pred_check_branch
      %22 = sbr.rel (0) target = $region9
    $region8: #{tpu_custom_call.1} parent=1 // pred_region
      _
    $region9: #{tpu_custom_call.1} parent=1 // pred_fallthru
      _
    // Predicated region
    $region10: #{tpu_custom_call.1} parent=1 // pred_check
      _
    $region11: #{tpu_custom_call.1} parent=1 // pred_check_branch
      %24 = sbr.rel (0) target = $region13
    $region12: #{tpu_custom_call.1} parent=1 // pred_region
      %s26 = ssub.s32 640, 640
      %27 = vsyncadd [#allocation3], %s26
      %s28 = sshll.u32 [#allocation2], 4
      %s29 = int_to_ptr.vmem [resolvable:$true] %s28
      %34 = dma.hbm_to_vmem [thread:$0]  %s2, 640, %s29, [#allocation3], 128, 128, 8
    $region13: #{tpu_custom_call.1} parent=1 // pred_fallthru
      _
    // Predicated region
    $region14: #{tpu_custom_call.1} parent=1 // pred_check
      _
    $region15: #{tpu_custom_call.1} parent=1 // pred_check_branch
      %36 = sbr.rel (0) target = $region17
    $region16: #{tpu_custom_call.1} parent=1 // pred_region
      _
    $region17: #{tpu_custom_call.1} parent=1 // pred_fallthru
      _
    // Predicated region
    $region18: #{tpu_custom_call.1} parent=1 // pred_check
      _
    $region19: #{tpu_custom_call.1} parent=1 // pred_check_branch
      %38 = sbr.rel (0) target = $region21
    $region20: #{tpu_custom_call.1} parent=1 // pred_region
      %s40 = ssub.s32 2048, 2048
      %41 = vsyncadd [#allocation6], %s40
      %s42 = sshll.u32 [#allocation5], 4
      %s43 = int_to_ptr.vmem [resolvable:$true] %s42
      %48 = dma.hbm_to_vmem [thread:$0]  %s4, 2048, %s43, [#allocation6], 128, 128, 8
    $region21: #{tpu_custom_call.1} parent=1 // pred_fallthru
      _
    // Predicated region
    $region22: #{tpu_custom_call.1} parent=1 // pred_check
      _
    $region23: #{tpu_custom_call.1} parent=1 // pred_check_branch
      %50 = sbr.rel (0) target = $region25
    $region24: #{tpu_custom_call.1} parent=1 // pred_region
      _
    $region25: #{tpu_custom_call.1} parent=1 // pred_fallthru
      _
    // Predicated region
    $region26: #{tpu_custom_call.1} parent=1 // pred_check
      _
    $region27: #{tpu_custom_call.1} parent=1 // pred_check_branch
      %52 = sbr.rel (0) target = $region29
    $region28: #{tpu_custom_call.1} parent=1 // pred_region
      %s54 = ssub.s32 2048, 2048
      %55 = vsyncadd [#allocation6], %s54
      %s56 = sshll.u32 [#allocation7], 4
      %s57 = int_to_ptr.vmem [resolvable:$true] %s56
      %62 = dma.hbm_to_vmem [thread:$0]  %s6, 2048, %s57, [#allocation6], 128, 128, 8
    $region29: #{tpu_custom_call.1} parent=1 // pred_fallthru
      _
    // Predicated region
    $region30: #{tpu_custom_call.1} parent=1 // pred_check
      _
    $region31: #{tpu_custom_call.1} parent=1 // pred_check_branch
      %64 = sbr.rel (0) target = $region33
    $region32: #{tpu_custom_call.1} parent=1 // pred_region
      _
    $region33: #{tpu_custom_call.1} parent=1 // pred_fallthru
      _
    // Predicated region
    $region34: #{tpu_custom_call.1} parent=1 // pred_check
      _
    $region35: #{tpu_custom_call.1} parent=1 // pred_check_branch
      %66 = sbr.rel (0) target = $region37
    $region36: #{tpu_custom_call.1} parent=1 // pred_region
      %67 = dma.done [#allocation3], 640
    $region37: #{tpu_custom_call.1} parent=1 // pred_fallthru
      _
    // Predicated region
    $region38: #{tpu_custom_call.1} parent=1 // pred_check
      _
    $region39: #{tpu_custom_call.1} parent=1 // pred_check_branch
      %69 = sbr.rel (0) target = $region41
    $region40: #{tpu_custom_call.1} parent=1 // pred_region
      %70 = dma.done [#allocation6], 2048
    $region41: #{tpu_custom_call.1} parent=1 // pred_fallthru
      _
    // Predicated region
    $region42: #{tpu_custom_call.1} parent=1 // pred_check
      _
    $region43: #{tpu_custom_call.1} parent=1 // pred_check_branch
      %72 = sbr.rel (0) target = $region45
    $region44: #{tpu_custom_call.1} parent=1 // pred_region
      %73 = dma.done [#allocation6], 2048
    $region45: #{tpu_custom_call.1} parent=1 // pred_fallthru
      _
    %v74 = vld [vmem:[%s0] sm:$0xff]
    %v75 = vld [vmem:[#allocation2] sm:$0xff]
    %v76 = vld [vmem:[#allocation2 + $0x8] sm:$0xff]
    %v77 = vld [vmem:[#allocation2 + $0x10] sm:$0xff]
    %v78 = vld [vmem:[#allocation2 + $0x18] sm:$0xff]
    %v79 = vld [vmem:[#allocation2 + $0x20] sm:$0xff]
    %v80 = vld [vmem:[%s3] sm:$0x1]
    %v82 = vlaneseq
    %v83 = vshrl.u32 %v82, 7
    %v84 = vsub.s32 0, %v83
    %v85 = vrot.slane %v80, %v84
    %vm87 = vcmask 326656
    %v89 = vsel %vm87, %v74, 0
    %91 = vmatprep.subr.mxu0 0.0
    %92 = vmatpush1.msra.mxu0 %v75
    %93 = vmatprep.subr.mxu0 0.0
    %94 = vmatpush1.msra.mxu0 %v76
    %95 = vmatprep.subr.mxu0 0.0
    %96 = vmatpush1.msra.mxu0 %v77
    %97 = vmatprep.subr.mxu0 0.0
    %98 = vmatpush1.msra.mxu0 %v78
    %99 = vmatprep.subr.mxu0 0.0
    %100 = vmatpush1.msra.mxu0 %v79
    %101 = vmatprep.subr.mxu0 0.0
    %102 = vmatpush1.msra.mxu0 0.0
    %103 = vmatprep.subr.mxu0 0.0
    %104 = vmatpush1.msra.mxu0 0.0
    %105 = vmatprep.subr.mxu0 0.0
    %106 = vmatpush1.msra.mxu0 0.0
    %107 = vmatprep.subr.mxu0 0.0
    %108 = vmatpush1.msra.mxu0 0.0
    %109 = vmatprep.subr.mxu0 0.0
    %110 = vmatpush1.msra.mxu0 0.0
    %111 = vmatprep.subr.mxu0 0.0
    %112 = vmatpush1.msra.mxu0 0.0
    %113 = vmatprep.subr.mxu0 0.0
    %114 = vmatpush1.msra.mxu0 0.0
    %115 = vmatprep.subr.mxu0 0.0
    %116 = vmatpush1.msra.mxu0 0.0
    %117 = vmatprep.subr.mxu0 0.0
    %118 = vmatpush1.msra.mxu0 0.0
    %119 = vmatprep.subr.mxu0 0.0
    %120 = vmatpush1.msra.mxu0 0.0
    %121 = vmatprep.subr.mxu0 0.0
    %122 = vmatpush1.msra.mxu0 0.0
    %123 = vmatprep.subr.mxu0 0.0
    %124 = vmatpush1.msra.mxu0 0.0
    %125 = vmatprep.subr.mxu0 0.0
    %126 = vmatpush1.msra.mxu0 0.0
    %127 = vmatprep.subr.mxu0 0.0
    %128 = vmatpush1.msra.mxu0 0.0
    %129 = vmatprep.subr.mxu0 0.0
    %130 = vmatpush1.msra.mxu0 0.0
    %131 = vmatprep.subr.mxu0 0.0
    %132 = vmatpush1.msra.mxu0 0.0
    %133 = vmatprep.subr.mxu0 0.0
    %134 = vmatpush1.msra.mxu0 0.0
    %135 = vmatprep.subr.mxu0 0.0
    %136 = vmatpush1.msra.mxu0 0.0
    %137 = vmatprep.subr.mxu0 0.0
    %138 = vmatpush1.msra.mxu0 0.0
    %139 = vmatprep.subr.mxu0 0.0
    %140 = vmatpush1.msra.mxu0 0.0
    %141 = vmatprep.subr.mxu0 0.0
    %142 = vmatpush1.msra.mxu0 0.0
    %143 = vmatprep.subr.mxu0 0.0
    %144 = vmatpush1.msra.mxu0 0.0
    %145 = vmatprep.subr.mxu0 0.0
    %146 = vmatpush1.msra.mxu0 0.0
    %147 = vmatprep.subr.mxu0 0.0
    %148 = vmatpush1.msra.mxu0 0.0
    %149 = vmatprep.subr.mxu0 0.0
    %150 = vmatpush1.msra.mxu0 0.0
    %151 = vmatprep.subr.mxu0 0.0
    %152 = vmatpush1.msra.mxu0 0.0
    %153 = vmatprep.subr.mxu0 0.0
    %154 = vmatpush1.msra.mxu0 0.0
    %155 = vmatprep.mubr.f32.mxu0 0.0
    %156 = vmatmul.mubr.f32.gmra.mrb[0].mxu0 %v89
    %v157 = vpop.f32.mrb[0].mxu0
    %v158 = vadd.f32 %v85, %v157
    %v159 = vpop.f32.mrb[0].mxu0
    %160 = vdwg.mxu0
    %v161 = vmax.f32 %v158, 0.0
    %v162 = vld [vmem:[#allocation5] sm:$0xff]
    %v163 = vld [vmem:[#allocation5 + $0x8] sm:$0xff]
    %v164 = vld [vmem:[#allocation5 + $0x10] sm:$0xff]
    %v165 = vld [vmem:[#allocation5 + $0x18] sm:$0xff]
    %v166 = vld [vmem:[#allocation5 + $0x20] sm:$0xff]
    %v167 = vld [vmem:[#allocation5 + $0x28] sm:$0xff]
    %v168 = vld [vmem:[#allocation5 + $0x30] sm:$0xff]
    %v169 = vld [vmem:[#allocation5 + $0x38] sm:$0xff]
    %v170 = vld [vmem:[#allocation5 + $0x40] sm:$0xff]
    %v171 = vld [vmem:[#allocation5 + $0x48] sm:$0xff]
    %v172 = vld [vmem:[#allocation5 + $0x50] sm:$0xff]
    %v173 = vld [vmem:[#allocation5 + $0x58] sm:$0xff]
    %v174 = vld [vmem:[#allocation5 + $0x60] sm:$0xff]
    %v175 = vld [vmem:[#allocation5 + $0x68] sm:$0xff]
    %v176 = vld [vmem:[#allocation5 + $0x70] sm:$0xff]
    %v177 = vld [vmem:[#allocation5 + $0x78] sm:$0xff]
    %v178 = vld [vmem:[%s5] sm:$0x1]
    %v180 = vlaneseq
    %v181 = vshrl.u32 %v180, 7
    %v182 = vsub.s32 0, %v181
    %v183 = vrot.slane %v178, %v182
    %185 = vmatprep.subr.mxu0 0.0
    %186 = vmatpush1.msra.mxu0 %v162
    %187 = vmatprep.subr.mxu0 0.0
    %188 = vmatpush1.msra.mxu0 %v163
    %189 = vmatprep.subr.mxu0 0.0
    %190 = vmatpush1.msra.mxu0 %v164
    %191 = vmatprep.subr.mxu0 0.0
    %192 = vmatpush1.msra.mxu0 %v165
    %193 = vmatprep.subr.mxu0 0.0
    %194 = vmatpush1.msra.mxu0 %v166
    %195 = vmatprep.subr.mxu0 0.0
    %196 = vmatpush1.msra.mxu0 %v167
    %197 = vmatprep.subr.mxu0 0.0
    %198 = vmatpush1.msra.mxu0 %v168
    %199 = vmatprep.subr.mxu0 0.0
    %200 = vmatpush1.msra.mxu0 %v169
    %201 = vmatprep.subr.mxu0 0.0
    %202 = vmatpush1.msra.mxu0 %v170
    %203 = vmatprep.subr.mxu0 0.0
    %204 = vmatpush1.msra.mxu0 %v171
    %205 = vmatprep.subr.mxu0 0.0
    %206 = vmatpush1.msra.mxu0 %v172
    %207 = vmatprep.subr.mxu0 0.0
    %208 = vmatpush1.msra.mxu0 %v173
    %209 = vmatprep.subr.mxu0 0.0
    %210 = vmatpush1.msra.mxu0 %v174
    %211 = vmatprep.subr.mxu0 0.0
    %212 = vmatpush1.msra.mxu0 %v175
    %213 = vmatprep.subr.mxu0 0.0
    %214 = vmatpush1.msra.mxu0 %v176
    %215 = vmatprep.subr.mxu0 0.0
    %216 = vmatpush1.msra.mxu0 %v177
    %217 = vmatprep.subr.mxu0 0.0
    %218 = vmatpush1.msra.mxu0 0.0
    %219 = vmatprep.subr.mxu0 0.0
    %220 = vmatpush1.msra.mxu0 0.0
    %221 = vmatprep.subr.mxu0 0.0
    %222 = vmatpush1.msra.mxu0 0.0
    %223 = vmatprep.subr.mxu0 0.0
    %224 = vmatpush1.msra.mxu0 0.0
    %225 = vmatprep.subr.mxu0 0.0
    %226 = vmatpush1.msra.mxu0 0.0
    %227 = vmatprep.subr.mxu0 0.0
    %228 = vmatpush1.msra.mxu0 0.0
    %229 = vmatprep.subr.mxu0 0.0
    %230 = vmatpush1.msra.mxu0 0.0
    %231 = vmatprep.subr.mxu0 0.0
    %232 = vmatpush1.msra.mxu0 0.0
    %233 = vmatprep.subr.mxu0 0.0
    %234 = vmatpush1.msra.mxu0 0.0
    %235 = vmatprep.subr.mxu0 0.0
    %236 = vmatpush1.msra.mxu0 0.0
    %237 = vmatprep.subr.mxu0 0.0
    %238 = vmatpush1.msra.mxu0 0.0
    %239 = vmatprep.subr.mxu0 0.0
    %240 = vmatpush1.msra.mxu0 0.0
    %241 = vmatprep.subr.mxu0 0.0
    %242 = vmatpush1.msra.mxu0 0.0
    %243 = vmatprep.subr.mxu0 0.0
    %244 = vmatpush1.msra.mxu0 0.0
    %245 = vmatprep.subr.mxu0 0.0
    %246 = vmatpush1.msra.mxu0 0.0
    %247 = vmatprep.subr.mxu0 0.0
    %248 = vmatpush1.msra.mxu0 0.0
    %249 = vmatprep.mubr.f32.mxu0 0.0
    %250 = vmatmul.mubr.f32.gmra.mrb[0].mxu0 %v161
    %v251 = vpop.f32.mrb[0].mxu0
    %v252 = vadd.f32 %v183, %v251
    %v253 = vpop.f32.mrb[0].mxu0
    %254 = vdwg.mxu0
    %v255 = vmax.f32 %v252, 0.0
    %v256 = vld [vmem:[#allocation7] sm:$0xff]
    %v257 = vld [vmem:[#allocation7 + $0x8] sm:$0xff]
    %v258 = vld [vmem:[#allocation7 + $0x10] sm:$0xff]
    %v259 = vld [vmem:[#allocation7 + $0x18] sm:$0xff]
    %v260 = vld [vmem:[#allocation7 + $0x20] sm:$0xff]
    %v261 = vld [vmem:[#allocation7 + $0x28] sm:$0xff]
    %v262 = vld [vmem:[#allocation7 + $0x30] sm:$0xff]
    %v263 = vld [vmem:[#allocation7 + $0x38] sm:$0xff]
    %v264 = vld [vmem:[#allocation7 + $0x40] sm:$0xff]
    %v265 = vld [vmem:[#allocation7 + $0x48] sm:$0xff]
    %v266 = vld [vmem:[#allocation7 + $0x50] sm:$0xff]
    %v267 = vld [vmem:[#allocation7 + $0x58] sm:$0xff]
    %v268 = vld [vmem:[#allocation7 + $0x60] sm:$0xff]
    %v269 = vld [vmem:[#allocation7 + $0x68] sm:$0xff]
    %v270 = vld [vmem:[#allocation7 + $0x70] sm:$0xff]
    %v271 = vld [vmem:[#allocation7 + $0x78] sm:$0xff]
    %v272 = vld [vmem:[%s7] sm:$0x1]
    %v274 = vlaneseq
    %v275 = vshrl.u32 %v274, 7
    %v276 = vsub.s32 0, %v275
    %v277 = vrot.slane %v272, %v276
    %279 = vmatprep.subr.mxu0 0.0
    %280 = vmatpush1.msra.mxu0 %v256
    %281 = vmatprep.subr.mxu0 0.0
    %282 = vmatpush1.msra.mxu0 %v257
    %283 = vmatprep.subr.mxu0 0.0
    %284 = vmatpush1.msra.mxu0 %v258
    %285 = vmatprep.subr.mxu0 0.0
    %286 = vmatpush1.msra.mxu0 %v259
    %287 = vmatprep.subr.mxu0 0.0
    %288 = vmatpush1.msra.mxu0 %v260
    %289 = vmatprep.subr.mxu0 0.0
    %290 = vmatpush1.msra.mxu0 %v261
    %291 = vmatprep.subr.mxu0 0.0
    %292 = vmatpush1.msra.mxu0 %v262
    %293 = vmatprep.subr.mxu0 0.0
    %294 = vmatpush1.msra.mxu0 %v263
    %295 = vmatprep.subr.mxu0 0.0
    %296 = vmatpush1.msra.mxu0 %v264
    %297 = vmatprep.subr.mxu0 0.0
    %298 = vmatpush1.msra.mxu0 %v265
    %299 = vmatprep.subr.mxu0 0.0
    %300 = vmatpush1.msra.mxu0 %v266
    %301 = vmatprep.subr.mxu0 0.0
    %302 = vmatpush1.msra.mxu0 %v267
    %303 = vmatprep.subr.mxu0 0.0
    %304 = vmatpush1.msra.mxu0 %v268
    %305 = vmatprep.subr.mxu0 0.0
    %306 = vmatpush1.msra.mxu0 %v269
    %307 = vmatprep.subr.mxu0 0.0
    %308 = vmatpush1.msra.mxu0 %v270
    %309 = vmatprep.subr.mxu0 0.0
    %310 = vmatpush1.msra.mxu0 %v271
    %311 = vmatprep.subr.mxu0 0.0
    %312 = vmatpush1.msra.mxu0 0.0
    %313 = vmatprep.subr.mxu0 0.0
    %314 = vmatpush1.msra.mxu0 0.0
    %315 = vmatprep.subr.mxu0 0.0
    %316 = vmatpush1.msra.mxu0 0.0
    %317 = vmatprep.subr.mxu0 0.0
    %318 = vmatpush1.msra.mxu0 0.0
    %319 = vmatprep.subr.mxu0 0.0
    %320 = vmatpush1.msra.mxu0 0.0
    %321 = vmatprep.subr.mxu0 0.0
    %322 = vmatpush1.msra.mxu0 0.0
    %323 = vmatprep.subr.mxu0 0.0
    %324 = vmatpush1.msra.mxu0 0.0
    %325 = vmatprep.subr.mxu0 0.0
    %326 = vmatpush1.msra.mxu0 0.0
    %327 = vmatprep.subr.mxu0 0.0
    %328 = vmatpush1.msra.mxu0 0.0
    %329 = vmatprep.subr.mxu0 0.0
    %330 = vmatpush1.msra.mxu0 0.0
    %331 = vmatprep.subr.mxu0 0.0
    %332 = vmatpush1.msra.mxu0 0.0
    %333 = vmatprep.subr.mxu0 0.0
    %334 = vmatpush1.msra.mxu0 0.0
    %335 = vmatprep.subr.mxu0 0.0
    %336 = vmatpush1.msra.mxu0 0.0
    %337 = vmatprep.subr.mxu0 0.0
    %338 = vmatpush1.msra.mxu0 0.0
    %339 = vmatprep.subr.mxu0 0.0
    %340 = vmatpush1.msra.mxu0 0.0
    %341 = vmatprep.subr.mxu0 0.0
    %342 = vmatpush1.msra.mxu0 0.0
    %343 = vmatprep.mubr.f32.mxu0 0.0
    %344 = vmatmul.mubr.f32.gmra.mrb[0].mxu0 %v255
    %v345 = vpop.f32.mrb[0].mxu0
    %v346 = vadd.f32 %v277, %v345
    %v347 = vpop.f32.mrb[0].mxu0
    %348 = vdwg.mxu0
    %349 = vmax.xlane.f32.xlu0 %v346
    %v350 = vpop.xlane.xlu0 %349
    %v351 = vsub.f32 %v346, %v350
    %v352 = vmul.f32 %v351, 1.442695
    %v353 = vpow.pop %v352
    %354 = vadd.xlane.f32.xlu0 %v353
    %v355 = vpop.xlane.xlu0 %354
    %v356 = vlog2.pop %v355
    %v357 = vmul.f32 %v356, 0.6931472
    %v358 = vadd.f32 %v350, %v357
    %v359 = vsub.f32 %v346, %v358
    %360 = vst [vmem:[#allocation8] sm:$0xff] %v359
    %v361 = vlaneseq
    %v362 = vand.u32 %v361, 127
    %363 = vmax.xlane.f32.xlu0 %v359
    %v364 = vpop.xlane.xlu0 %363
    %vm365 = vcmp.eq.f32.partialorder %v359, %v364
    %v366 = vsel %vm365, %v362, 128
    %v367 = vand.u32 %v366, 65535
    %v368 = vshra.s32 %v366, 16
    %v369 = vcvt.s32.f32 %v367
    %v370 = vcvt.s32.f32 %v368
    %371 = vmin.xlane.f32.xlu0 %v370
    %v372 = vpop.xlane.xlu0 %371
    %vm373 = vcmp.eq.f32.partialorder %v370, %v372
    %v374 = vsel %vm373, %v369, inf
    %375 = vmin.xlane.f32.xlu0 %v374
    %v376 = vpop.xlane.xlu0 %375
    %v377 = vcvt.f32.s32 %v376
    %v378 = vcvt.f32.s32 %v372
    %v379 = vshll.u32 %v378, 16
    %v380 = vadd.s32 %v379, %v377
    %vm381 = vcmask 7168
    %382 = vst.msk [vmem:[%s9] sm:$0xff] %vm381, %v380
    %v383 = vld [vmem:[%s1] sm:$0xff]
    %384 = vset.pattern.permute.xlu0 0
    %385 = vperm.xlu0 %384, %v383
    %v386 = vpop.permute.xlu0 %385
    %vm387 = vcmp.eq.s32.totalorder %v362, %v386
    %v388 = vsel %vm387, %v359, 0.0
    %389 = vadd.xlane.f32.xlu0 %v388
    %v390 = vpop.xlane.xlu0 %389
    %391 = vst.msk [vmem:[%s10] sm:$0xff] %vm381, %v390
    // Predicated region
    $region46: #{tpu_custom_call.1} parent=1 // pred_check
      _
    $region47: #{tpu_custom_call.1} parent=1 // pred_check_branch
      %393 = sbr.rel (0) target = $region49
    $region48: #{tpu_custom_call.1} parent=1 // pred_region
      %s395 = ssub.s32 128, 128
      %396 = vsyncadd [#allocation4], %s395
      %s398 = sshll.u32 [#allocation8], 4
      %s399 = int_to_ptr.vmem [resolvable:$true] %s398
      %401 = dma.vmem_to_hbm [thread:$0]  %s399, 128, %s8, [#allocation4]
    $region49: #{tpu_custom_call.1} parent=1 // pred_fallthru
      _
    // Predicated region
    $region50: #{tpu_custom_call.1} parent=1 // pred_check
      _
    $region51: #{tpu_custom_call.1} parent=1 // pred_check_branch
      %403 = sbr.rel (0) target = $region53
    $region52: #{tpu_custom_call.1} parent=1 // pred_region
      _
    $region53: #{tpu_custom_call.1} parent=1 // pred_fallthru
      _
    // Predicated region
    $region54: #{tpu_custom_call.1} parent=1 // pred_check
      _
    $region55: #{tpu_custom_call.1} parent=1 // pred_check_branch
      %405 = sbr.rel (0) target = $region57
    $region56: #{tpu_custom_call.1} parent=1 // pred_region
      _
    $region57: #{tpu_custom_call.1} parent=1 // pred_fallthru
      _
    // Predicated region
    $region58: #{tpu_custom_call.1} parent=1 // pred_check
      _
    $region59: #{tpu_custom_call.1} parent=1 // pred_check_branch
      %407 = sbr.rel (0) target = $region61
    $region60: #{tpu_custom_call.1} parent=1 // pred_region
      %408 = dma.done [#allocation4], 128
    $region61: #{tpu_custom_call.1} parent=1 // pred_fallthru
      _
    // Predicated region
    $region62: #{tpu_custom_call.1} parent=1 // pred_check
      _
    $region63: #{tpu_custom_call.1} parent=1 // pred_check_branch
      %410 = sbr.rel (0) target = $region65
    $region64: #{tpu_custom_call.1} parent=1 // pred_region
      _
    $region65: #{tpu_custom_call.1} parent=1 // pred_fallthru
      _
    // Predicated region
    $region66: #{tpu_custom_call.1} parent=1 // pred_check
      _
    $region67: #{tpu_custom_call.1} parent=1 // pred_check_branch
      %412 = sbr.rel (0) target = $region69
    $region68: #{tpu_custom_call.1} parent=1 // pred_region
      _
    $region69: #{tpu_custom_call.1} parent=1 // pred_fallthru
      _
    %413 = vsyncpa [#allocation3], 1
    %414 = vsyncpa [#allocation6], 1
    %415 = vsyncpa [#allocation4], 1

// kernel: tpu_custom_call.1
$region0: #{tpu_custom_call.1}
  #allocation0 [shape = 'u32[]', space=smem, size = 0x4, offset = 0x4, fixed_abs, tag = 'smem constant byte address 0x4 - core index']
  #allocation1 [shape = 'u32[144,128]{1,0:T(1,128)}', space=vmem, size = 0x12000, scoped, tag = 'internal scratch']
  %s0 = inlined_call_operand.vmem [shape: f32[8,40], index: 0, kind: input, shape index: {}]
  %s1 = inlined_call_operand.vmem [shape: s32[8,1], index: 1, kind: input, shape index: {}]
  %s2 = inlined_call_operand.hbm [shape: f32[40,128], index: 2, kind: input, shape index: {}]
  %s3 = inlined_call_operand.vmem [shape: f32[1,128], index: 3, kind: input, shape index: {}]
  %s4 = inlined_call_operand.hbm [shape: f32[128,128], index: 4, kind: input, shape index: {}]
  %s5 = inlined_call_operand.vmem [shape: f32[1,128], index: 5, kind: input, shape index: {}]
  %s6 = inlined_call_operand.hbm [shape: f32[128,128], index: 6, kind: input, shape index: {}]
  %s7 = inlined_call_operand.vmem [shape: f32[1,128], index: 7, kind: input, shape index: {}]
  %s8 = inlined_call_operand.hbm [shape: f32[8,128], index: 8, kind: output, shape index: {0}]
  %s9 = inlined_call_operand.vmem [shape: s32[8,1], index: 9, kind: output, shape index: {1}]
  %s10 = inlined_call_operand.vmem [shape: f32[8,1], index: 10, kind: output, shape index: {2}]
  %11 = xla_tuple %s8, %s9, %s10
  %s12 = sld [smem:[#allocation0]]
  $region70: #{tpu_custom_call.1} parent=0
    _
  %s14 = ssub.s32 1, %s12
  %s15 = scalar_select 0, %s14, %s12
  $region1: #{tpu_custom_call.1} parent=0
    #allocation2 [shape = 'u8[20480]{0}', space=vmem, size = 0x5000, scoped, tag = 'input window, operand 2, single buffered']
    #allocation3 [shape = 's32[1]{0}', space=sflag, size = 0x4, scoped, tag = 'scoped memory for tpu_custom_call.1']
    #allocation4 [shape = 's32[1]{0}', space=sflag, size = 0x4, scoped, tag = 'scoped memory for tpu_custom_call.1']
    #allocation5 [shape = 'u8[65536]{0}', space=vmem, size = 0x10000, scoped, tag = 'input window, operand 4, single buffered']
    #allocation6 [shape = 's32[1]{0}', space=sflag, size = 0x4, scoped, tag = 'scoped memory for tpu_custom_call.1']
    #allocation7 [shape = 'u8[65536]{0}', space=vmem, size = 0x10000, scoped, tag = 'input window, operand 6, single buffered']
    #allocation8 [shape = 'u8[4096]{0}', space=vmem, size = 0x1000, scoped, tag = 'output window, operand 0, single buffered']
    %16 = vsyncpa [#allocation3], 0
    %17 = vsyncpa [#allocation6], 0
    %18 = vsyncpa [#allocation4], 0
    // Predicated region
    $region2: #{tpu_custom_call.1} parent=1 // pred_check
      _
    $region3: #{tpu_custom_call.1} parent=1 // pred_check_branch
      %20 = sbr.rel (0) target = $region5
    $region4: #{tpu_custom_call.1} parent=1 // pred_region
      _
    $region5: #{tpu_custom_call.1} parent=1 // pred_fallthru
      _
    // Predicated region
    $region6: #{tpu_custom_call.1} parent=1 // pred_check
      _
    $region7: #{tpu_custom_call.1} parent=1 // pred_check_branch
      %22 = sbr.rel (0) target = $region9
    $region8: #{tpu_custom_call.1} parent=1 // pred_region
      _
    $region9: #{tpu_custom_call.1} parent=1 // pred_fallthru
      _
    // Predicated region
    $region10: #{tpu_custom_call.1} parent=1 // pred_check
      _
    $region11: #{tpu_custom_call.1} parent=1 // pred_check_branch
      %24 = sbr.rel (0) target = $region13
    $region12: #{tpu_custom_call.1} parent=1 // pred_region
      %s26 = ssub.s32 640, 640
      %27 = vsyncadd [#allocation3], %s26
      %s28 = sshll.u32 [#allocation2], 4
      %s29 = int_to_ptr.vmem [resolvable:$true] %s28
      %34 = dma.hbm_to_vmem [thread:$0]  %s2, 640, %s29, [#allocation3], 128, 128, 8
    $region13: #{tpu_custom_call.1} parent=1 // pred_fallthru
      _
    // Predicated region
    $region14: #{tpu_custom_call.1} parent=1 // pred_check
      _
    $region15: #{tpu_custom_call.1} parent=1 // pred_check_branch
      %36 = sbr.rel (0) target = $region17
    $region16: #{tpu_custom_call.1} parent=1 // pred_region
      _
    $region17: #{tpu_custom_call.1} parent=1 // pred_fallthru
      _
    // Predicated region
    $region18: #{tpu_custom_call.1} parent=1 // pred_check
      _
    $region19: #{tpu_custom_call.1} parent=1 // pred_check_branch
      %38 = sbr.rel (0) target = $region21
    $region20: #{tpu_custom_call.1} parent=1 // pred_region
      %s40 = ssub.s32 2048, 2048
      %41 = vsyncadd [#allocation6], %s40
      %s42 = sshll.u32 [#allocation5], 4
      %s43 = int_to_ptr.vmem [resolvable:$true] %s42
      %48 = dma.hbm_to_vmem [thread:$0]  %s4, 2048, %s43, [#allocation6], 128, 128, 8
    $region21: #{tpu_custom_call.1} parent=1 // pred_fallthru
      _
    // Predicated region
    $region22: #{tpu_custom_call.1} parent=1 // pred_check
      _
    $region23: #{tpu_custom_call.1} parent=1 // pred_check_branch
      %50 = sbr.rel (0) target = $region25
    $region24: #{tpu_custom_call.1} parent=1 // pred_region
      _
    $region25: #{tpu_custom_call.1} parent=1 // pred_fallthru
      _
    // Predicated region
    $region26: #{tpu_custom_call.1} parent=1 // pred_check
      _
    $region27: #{tpu_custom_call.1} parent=1 // pred_check_branch
      %52 = sbr.rel (0) target = $region29
    $region28: #{tpu_custom_call.1} parent=1 // pred_region
      %s54 = ssub.s32 2048, 2048
      %55 = vsyncadd [#allocation6], %s54
      %s56 = sshll.u32 [#allocation7], 4
      %s57 = int_to_ptr.vmem [resolvable:$true] %s56
      %62 = dma.hbm_to_vmem [thread:$0]  %s6, 2048, %s57, [#allocation6], 128, 128, 8
    $region29: #{tpu_custom_call.1} parent=1 // pred_fallthru
      _
    // Predicated region
    $region30: #{tpu_custom_call.1} parent=1 // pred_check
      _
    $region31: #{tpu_custom_call.1} parent=1 // pred_check_branch
      %64 = sbr.rel (0) target = $region33
    $region32: #{tpu_custom_call.1} parent=1 // pred_region
      _
    $region33: #{tpu_custom_call.1} parent=1 // pred_fallthru
      _
    // Predicated region
    $region34: #{tpu_custom_call.1} parent=1 // pred_check
      _
    $region35: #{tpu_custom_call.1} parent=1 // pred_check_branch
      %66 = sbr.rel (0) target = $region37
    $region36: #{tpu_custom_call.1} parent=1 // pred_region
      %67 = dma.done [#allocation3], 640
    $region37: #{tpu_custom_call.1} parent=1 // pred_fallthru
      _
    // Predicated region
    $region38: #{tpu_custom_call.1} parent=1 // pred_check
      _
    $region39: #{tpu_custom_call.1} parent=1 // pred_check_branch
      %69 = sbr.rel (0) target = $region41
    $region40: #{tpu_custom_call.1} parent=1 // pred_region
      %70 = dma.done [#allocation6], 2048
    $region41: #{tpu_custom_call.1} parent=1 // pred_fallthru
      _
    // Predicated region
    $region42: #{tpu_custom_call.1} parent=1 // pred_check
      _
    $region43: #{tpu_custom_call.1} parent=1 // pred_check_branch
      %72 = sbr.rel (0) target = $region45
    $region44: #{tpu_custom_call.1} parent=1 // pred_region
      %73 = dma.done [#allocation6], 2048
    $region45: #{tpu_custom_call.1} parent=1 // pred_fallthru
      _
    %v74 = vld [vmem:[%s0] sm:$0xff]
    %v75 = vld [vmem:[#allocation2] sm:$0xff]
    %v76 = vld [vmem:[#allocation2 + $0x8] sm:$0xff]
    %v77 = vld [vmem:[#allocation2 + $0x10] sm:$0xff]
    %v78 = vld [vmem:[#allocation2 + $0x18] sm:$0xff]
    %v79 = vld [vmem:[#allocation2 + $0x20] sm:$0xff]
    %v80 = vld [vmem:[%s3] sm:$0x1]
    %v82 = vlaneseq
    %v83 = vshrl.u32 %v82, 7
    %v84 = vsub.s32 0, %v83
    %v85 = vrot.slane %v80, %v84
    %vm87 = vcmask 326656
    %v89 = vsel %vm87, %v74, 0
    %91 = vmatprep.subr.mxu0 0.0
    %92 = vmatpush1.msra.mxu0 %v75
    %93 = vmatprep.subr.mxu0 0.0
    %94 = vmatpush1.msra.mxu0 %v76
    %95 = vmatprep.subr.mxu0 0.0
    %96 = vmatpush1.msra.mxu0 %v77
    %97 = vmatprep.subr.mxu0 0.0
    %98 = vmatpush1.msra.mxu0 %v78
    %99 = vmatprep.subr.mxu0 0.0
    %100 = vmatpush1.msra.mxu0 %v79
    %101 = vmatprep.subr.mxu0 0.0
    %102 = vmatpush1.msra.mxu0 0.0
    %103 = vmatprep.subr.mxu0 0.0
    %104 = vmatpush1.msra.mxu0 0.0
    %105 = vmatprep.subr.mxu0 0.0
    %106 = vmatpush1.msra.mxu0 0.0
    %107 = vmatprep.subr.mxu0 0.0
    %108 = vmatpush1.msra.mxu0 0.0
    %109 = vmatprep.subr.mxu0 0.0
    %110 = vmatpush1.msra.mxu0 0.0
    %111 = vmatprep.subr.mxu0 0.0
    %112 = vmatpush1.msra.mxu0 0.0
    %113 = vmatprep.subr.mxu0 0.0
    %114 = vmatpush1.msra.mxu0 0.0
    %115 = vmatprep.subr.mxu0 0.0
    %116 = vmatpush1.msra.mxu0 0.0
    %117 = vmatprep.subr.mxu0 0.0
    %118 = vmatpush1.msra.mxu0 0.0
    %119 = vmatprep.subr.mxu0 0.0
    %120 = vmatpush1.msra.mxu0 0.0
    %121 = vmatprep.subr.mxu0 0.0
    %122 = vmatpush1.msra.mxu0 0.0
    %123 = vmatprep.subr.mxu0 0.0
    %124 = vmatpush1.msra.mxu0 0.0
    %125 = vmatprep.subr.mxu0 0.0
    %126 = vmatpush1.msra.mxu0 0.0
    %127 = vmatprep.subr.mxu0 0.0
    %128 = vmatpush1.msra.mxu0 0.0
    %129 = vmatprep.subr.mxu0 0.0
    %130 = vmatpush1.msra.mxu0 0.0
    %131 = vmatprep.subr.mxu0 0.0
    %132 = vmatpush1.msra.mxu0 0.0
    %133 = vmatprep.subr.mxu0 0.0
    %134 = vmatpush1.msra.mxu0 0.0
    %135 = vmatprep.subr.mxu0 0.0
    %136 = vmatpush1.msra.mxu0 0.0
    %137 = vmatprep.subr.mxu0 0.0
    %138 = vmatpush1.msra.mxu0 0.0
    %139 = vmatprep.subr.mxu0 0.0
    %140 = vmatpush1.msra.mxu0 0.0
    %141 = vmatprep.subr.mxu0 0.0
    %142 = vmatpush1.msra.mxu0 0.0
    %143 = vmatprep.subr.mxu0 0.0
    %144 = vmatpush1.msra.mxu0 0.0
    %145 = vmatprep.subr.mxu0 0.0
    %146 = vmatpush1.msra.mxu0 0.0
    %147 = vmatprep.subr.mxu0 0.0
    %148 = vmatpush1.msra.mxu0 0.0
    %149 = vmatprep.subr.mxu0 0.0
    %150 = vmatpush1.msra.mxu0 0.0
    %151 = vmatprep.subr.mxu0 0.0
    %152 = vmatpush1.msra.mxu0 0.0
    %153 = vmatprep.subr.mxu0 0.0
    %154 = vmatpush1.msra.mxu0 0.0
    %155 = vmatprep.mubr.f32.mxu0 0.0
    %156 = vmatmul.mubr.f32.gmra.mrb[0].mxu0 %v89
    %v157 = vpop.f32.mrb[0].mxu0
    %v158 = vadd.f32 %v85, %v157
    %v159 = vpop.f32.mrb[0].mxu0
    %160 = vdwg.mxu0
    %v161 = vmax.f32 %v158, 0.0
    %v162 = vld [vmem:[#allocation5] sm:$0xff]
    %v163 = vld [vmem:[#allocation5 + $0x8] sm:$0xff]
    %v164 = vld [vmem:[#allocation5 + $0x10] sm:$0xff]
    %v165 = vld [vmem:[#allocation5 + $0x18] sm:$0xff]
    %v166 = vld [vmem:[#allocation5 + $0x20] sm:$0xff]
    %v167 = vld [vmem:[#allocation5 + $0x28] sm:$0xff]
    %v168 = vld [vmem:[#allocation5 + $0x30] sm:$0xff]
    %v169 = vld [vmem:[#allocation5 + $0x38] sm:$0xff]
    %v170 = vld [vmem:[#allocation5 + $0x40] sm:$0xff]
    %v171 = vld [vmem:[#allocation5 + $0x48] sm:$0xff]
    %v172 = vld [vmem:[#allocation5 + $0x50] sm:$0xff]
    %v173 = vld [vmem:[#allocation5 + $0x58] sm:$0xff]
    %v174 = vld [vmem:[#allocation5 + $0x60] sm:$0xff]
    %v175 = vld [vmem:[#allocation5 + $0x68] sm:$0xff]
    %v176 = vld [vmem:[#allocation5 + $0x70] sm:$0xff]
    %v177 = vld [vmem:[#allocation5 + $0x78] sm:$0xff]
    %v178 = vld [vmem:[%s5] sm:$0x1]
    %v180 = vlaneseq
    %v181 = vshrl.u32 %v180, 7
    %v182 = vsub.s32 0, %v181
    %v183 = vrot.slane %v178, %v182
    %185 = vmatprep.subr.mxu0 0.0
    %186 = vmatpush1.msra.mxu0 %v162
    %187 = vmatprep.subr.mxu0 0.0
    %188 = vmatpush1.msra.mxu0 %v163
    %189 = vmatprep.subr.mxu0 0.0
    %190 = vmatpush1.msra.mxu0 %v164
    %191 = vmatprep.subr.mxu0 0.0
    %192 = vmatpush1.msra.mxu0 %v165
    %193 = vmatprep.subr.mxu0 0.0
    %194 = vmatpush1.msra.mxu0 %v166
    %195 = vmatprep.subr.mxu0 0.0
    %196 = vmatpush1.msra.mxu0 %v167
    %197 = vmatprep.subr.mxu0 0.0
    %198 = vmatpush1.msra.mxu0 %v168
    %199 = vmatprep.subr.mxu0 0.0
    %200 = vmatpush1.msra.mxu0 %v169
    %201 = vmatprep.subr.mxu0 0.0
    %202 = vmatpush1.msra.mxu0 %v170
    %203 = vmatprep.subr.mxu0 0.0
    %204 = vmatpush1.msra.mxu0 %v171
    %205 = vmatprep.subr.mxu0 0.0
    %206 = vmatpush1.msra.mxu0 %v172
    %207 = vmatprep.subr.mxu0 0.0
    %208 = vmatpush1.msra.mxu0 %v173
    %209 = vmatprep.subr.mxu0 0.0
    %210 = vmatpush1.msra.mxu0 %v174
    %211 = vmatprep.subr.mxu0 0.0
    %212 = vmatpush1.msra.mxu0 %v175
    %213 = vmatprep.subr.mxu0 0.0
    %214 = vmatpush1.msra.mxu0 %v176
    %215 = vmatprep.subr.mxu0 0.0
    %216 = vmatpush1.msra.mxu0 %v177
    %217 = vmatprep.subr.mxu0 0.0
    %218 = vmatpush1.msra.mxu0 0.0
    %219 = vmatprep.subr.mxu0 0.0
    %220 = vmatpush1.msra.mxu0 0.0
    %221 = vmatprep.subr.mxu0 0.0
    %222 = vmatpush1.msra.mxu0 0.0
    %223 = vmatprep.subr.mxu0 0.0
    %224 = vmatpush1.msra.mxu0 0.0
    %225 = vmatprep.subr.mxu0 0.0
    %226 = vmatpush1.msra.mxu0 0.0
    %227 = vmatprep.subr.mxu0 0.0
    %228 = vmatpush1.msra.mxu0 0.0
    %229 = vmatprep.subr.mxu0 0.0
    %230 = vmatpush1.msra.mxu0 0.0
    %231 = vmatprep.subr.mxu0 0.0
    %232 = vmatpush1.msra.mxu0 0.0
    %233 = vmatprep.subr.mxu0 0.0
    %234 = vmatpush1.msra.mxu0 0.0
    %235 = vmatprep.subr.mxu0 0.0
    %236 = vmatpush1.msra.mxu0 0.0
    %237 = vmatprep.subr.mxu0 0.0
    %238 = vmatpush1.msra.mxu0 0.0
    %239 = vmatprep.subr.mxu0 0.0
    %240 = vmatpush1.msra.mxu0 0.0
    %241 = vmatprep.subr.mxu0 0.0
    %242 = vmatpush1.msra.mxu0 0.0
    %243 = vmatprep.subr.mxu0 0.0
    %244 = vmatpush1.msra.mxu0 0.0
    %245 = vmatprep.subr.mxu0 0.0
    %246 = vmatpush1.msra.mxu0 0.0
    %247 = vmatprep.subr.mxu0 0.0
    %248 = vmatpush1.msra.mxu0 0.0
    %249 = vmatprep.mubr.f32.mxu0 0.0
    %250 = vmatmul.mubr.f32.gmra.mrb[0].mxu0 %v161
    %v251 = vpop.f32.mrb[0].mxu0
    %v252 = vadd.f32 %v183, %v251
    %v253 = vpop.f32.mrb[0].mxu0
    %254 = vdwg.mxu0
    %v255 = vmax.f32 %v252, 0.0
    %v256 = vld [vmem:[#allocation7] sm:$0xff]
    %v257 = vld [vmem:[#allocation7 + $0x8] sm:$0xff]
    %v258 = vld [vmem:[#allocation7 + $0x10] sm:$0xff]
    %v259 = vld [vmem:[#allocation7 + $0x18] sm:$0xff]
    %v260 = vld [vmem:[#allocation7 + $0x20] sm:$0xff]
    %v261 = vld [vmem:[#allocation7 + $0x28] sm:$0xff]
    %v262 = vld [vmem:[#allocation7 + $0x30] sm:$0xff]
    %v263 = vld [vmem:[#allocation7 + $0x38] sm:$0xff]
    %v264 = vld [vmem:[#allocation7 + $0x40] sm:$0xff]
    %v265 = vld [vmem:[#allocation7 + $0x48] sm:$0xff]
    %v266 = vld [vmem:[#allocation7 + $0x50] sm:$0xff]
    %v267 = vld [vmem:[#allocation7 + $0x58] sm:$0xff]
    %v268 = vld [vmem:[#allocation7 + $0x60] sm:$0xff]
    %v269 = vld [vmem:[#allocation7 + $0x68] sm:$0xff]
    %v270 = vld [vmem:[#allocation7 + $0x70] sm:$0xff]
    %v271 = vld [vmem:[#allocation7 + $0x78] sm:$0xff]
    %v272 = vld [vmem:[%s7] sm:$0x1]
    %v274 = vlaneseq
    %v275 = vshrl.u32 %v274, 7
    %v276 = vsub.s32 0, %v275
    %v277 = vrot.slane %v272, %v276
    %279 = vmatprep.subr.mxu0 0.0
    %280 = vmatpush1.msra.mxu0 %v256
    %281 = vmatprep.subr.mxu0 0.0
    %282 = vmatpush1.msra.mxu0 %v257
    %283 = vmatprep.subr.mxu0 0.0
    %284 = vmatpush1.msra.mxu0 %v258
    %285 = vmatprep.subr.mxu0 0.0
    %286 = vmatpush1.msra.mxu0 %v259
    %287 = vmatprep.subr.mxu0 0.0
    %288 = vmatpush1.msra.mxu0 %v260
    %289 = vmatprep.subr.mxu0 0.0
    %290 = vmatpush1.msra.mxu0 %v261
    %291 = vmatprep.subr.mxu0 0.0
    %292 = vmatpush1.msra.mxu0 %v262
    %293 = vmatprep.subr.mxu0 0.0
    %294 = vmatpush1.msra.mxu0 %v263
    %295 = vmatprep.subr.mxu0 0.0
    %296 = vmatpush1.msra.mxu0 %v264
    %297 = vmatprep.subr.mxu0 0.0
    %298 = vmatpush1.msra.mxu0 %v265
    %299 = vmatprep.subr.mxu0 0.0
    %300 = vmatpush1.msra.mxu0 %v266
    %301 = vmatprep.subr.mxu0 0.0
    %302 = vmatpush1.msra.mxu0 %v267
    %303 = vmatprep.subr.mxu0 0.0
    %304 = vmatpush1.msra.mxu0 %v268
    %305 = vmatprep.subr.mxu0 0.0
    %306 = vmatpush1.msra.mxu0 %v269
    %307 = vmatprep.subr.mxu0 0.0
    %308 = vmatpush1.msra.mxu0 %v270
    %309 = vmatprep.subr.mxu0 0.0
    %310 = vmatpush1.msra.mxu0 %v271
    %311 = vmatprep.subr.mxu0 0.0
    %312 = vmatpush1.msra.mxu0 0.0
    %313 = vmatprep.subr.mxu0 0.0
    %314 = vmatpush1.msra.mxu0 0.0
    %315 = vmatprep.subr.mxu0 0.0
    %316 = vmatpush1.msra.mxu0 0.0
    %317 = vmatprep.subr.mxu0 0.0
    %318 = vmatpush1.msra.mxu0 0.0
    %319 = vmatprep.subr.mxu0 0.0
    %320 = vmatpush1.msra.mxu0 0.0
    %321 = vmatprep.subr.mxu0 0.0
    %322 = vmatpush1.msra.mxu0 0.0
    %323 = vmatprep.subr.mxu0 0.0
    %324 = vmatpush1.msra.mxu0 0.0
    %325 = vmatprep.subr.mxu0 0.0
    %326 = vmatpush1.msra.mxu0 0.0
    %327 = vmatprep.subr.mxu0 0.0
    %328 = vmatpush1.msra.mxu0 0.0
    %329 = vmatprep.subr.mxu0 0.0
    %330 = vmatpush1.msra.mxu0 0.0
    %331 = vmatprep.subr.mxu0 0.0
    %332 = vmatpush1.msra.mxu0 0.0
    %333 = vmatprep.subr.mxu0 0.0
    %334 = vmatpush1.msra.mxu0 0.0
    %335 = vmatprep.subr.mxu0 0.0
    %336 = vmatpush1.msra.mxu0 0.0
    %337 = vmatprep.subr.mxu0 0.0
    %338 = vmatpush1.msra.mxu0 0.0
    %339 = vmatprep.subr.mxu0 0.0
    %340 = vmatpush1.msra.mxu0 0.0
    %341 = vmatprep.subr.mxu0 0.0
    %342 = vmatpush1.msra.mxu0 0.0
    %343 = vmatprep.mubr.f32.mxu0 0.0
    %344 = vmatmul.mubr.f32.gmra.mrb[0].mxu0 %v255
    %v345 = vpop.f32.mrb[0].mxu0
    %v346 = vadd.f32 %v277, %v345
    %v347 = vpop.f32.mrb[0].mxu0
    %348 = vdwg.mxu0
    %349 = vmax.xlane.f32.xlu0 %v346
    %v350 = vpop.xlane.xlu0 %349
    %v351 = vsub.f32 %v346, %v350
    %v352 = vmul.f32 %v351, 1.442695
    %v353 = vpow.pop %v352
    %354 = vadd.xlane.f32.xlu0 %v353
    %v355 = vpop.xlane.xlu0 %354
    %v356 = vlog2.pop %v355
    %v357 = vmul.f32 %v356, 0.6931472
    %v358 = vadd.f32 %v350, %v357
    %v359 = vsub.f32 %v346, %v358
    %360 = vst [vmem:[#allocation8] sm:$0xff] %v359
    %v361 = vlaneseq
    %v362 = vand.u32 %v361, 127
    %363 = vmax.xlane.f32.xlu0 %v359
    %v364 = vpop.xlane.xlu0 %363
    %vm365 = vcmp.eq.f32.partialorder %v359, %v364
    %v366 = vsel %vm365, %v362, 128
    %v367 = vand.u32 %v366, 65535
    %v368 = vshra.s32 %v366, 16
    %v369 = vcvt.s32.f32 %v367
    %v370 = vcvt.s32.f32 %v368
    %371 = vmin.xlane.f32.xlu0 %v370
    %v372 = vpop.xlane.xlu0 %371
    %vm373 = vcmp.eq.f32.partialorder %v370, %v372
    %v374 = vsel %vm373, %v369, inf
    %375 = vmin.xlane.f32.xlu0 %v374
    %v376 = vpop.xlane.xlu0 %375
    %v377 = vcvt.f32.s32 %v376
    %v378 = vcvt.f32.s32 %v372
    %v379 = vshll.u32 %v378, 16
    %v380 = vadd.s32 %v379, %v377
    %vm381 = vcmask 7168
    %382 = vst.msk [vmem:[%s9] sm:$0xff] %vm381, %v380
    %v383 = vld [vmem:[%s1] sm:$0xff]
    %384 = vset.pattern.permute.xlu0 0
    %385 = vperm.xlu0 %384, %v383
    %v386 = vpop.permute.xlu0 %385
    %vm387 = vcmp.eq.s32.totalorder %v362, %v386
    %v388 = vsel %vm387, %v359, 0.0
    %389 = vadd.xlane.f32.xlu0 %v388
    %v390 = vpop.xlane.xlu0 %389
    %391 = vst.msk [vmem:[%s10] sm:$0xff] %vm381, %v390
    // Predicated region
    $region46: #{tpu_custom_call.1} parent=1 // pred_check
      _
    $region47: #{tpu_custom_call.1} parent=1 // pred_check_branch
      %393 = sbr.rel (0) target = $region49
    $region48: #{tpu_custom_call.1} parent=1 // pred_region
      %s395 = ssub.s32 128, 128
      %396 = vsyncadd [#allocation4], %s395
      %s398 = sshll.u32 [#allocation8], 4
      %s399 = int_to_ptr.vmem [resolvable:$true] %s398
      %401 = dma.vmem_to_hbm [thread:$0]  %s399, 128, %s8, [#allocation4]
    $region49: #{tpu_custom_call.1} parent=1 // pred_fallthru
      _
    // Predicated region
    $region50: #{tpu_custom_call.1} parent=1 // pred_check
      _
    $region51: #{tpu_custom_call.1} parent=1 // pred_check_branch
      %403 = sbr.rel (0) target = $region53
    $region52: #{tpu_custom_call.1} parent=1 // pred_region
      _
    $region53: #{tpu_custom_call.1} parent=1 // pred_fallthru
      _
    // Predicated region
    $region54: #{tpu_custom_call.1} parent=1 // pred_check
      _
    $region55: #{tpu_custom_call.1} parent=1 // pred_check_branch
      %405 = sbr.rel (0) target = $region57
    $region56: #{tpu_custom_call.1} parent=1 // pred_region
      _
    $region57: #{tpu_custom_call.1} parent=1 // pred_fallthru
      _
    // Predicated region
    $region58: #{tpu_custom_call.1} parent=1 // pred_check
      _
    $region59: #{tpu_custom_call.1} parent=1 // pred_check_branch
      %407 = sbr.rel (0) target = $region61
    $region60: #{tpu_custom_call.1} parent=1 // pred_region
      %408 = dma.done [#allocation4], 128
    $region61: #{tpu_custom_call.1} parent=1 // pred_fallthru
      _
    // Predicated region
    $region62: #{tpu_custom_call.1} parent=1 // pred_check
      _
    $region63: #{tpu_custom_call.1} parent=1 // pred_check_branch
      %410 = sbr.rel (0) target = $region65
    $region64: #{tpu_custom_call.1} parent=1 // pred_region
      _
    $region65: #{tpu_custom_call.1} parent=1 // pred_fallthru
      _
    // Predicated region
    $region66: #{tpu_custom_call.1} parent=1 // pred_check
      _
    $region67: #{tpu_custom_call.1} parent=1 // pred_check_branch
      %412 = sbr.rel (0) target = $region69
    $region68: #{tpu_custom_call.1} parent=1 // pred_region
      _
    $region69: #{tpu_custom_call.1} parent=1 // pred_fallthru
      _
    %413 = vsyncpa [#allocation3], 1
    %414 = vsyncpa [#allocation6], 1
    %415 = vsyncpa [#allocation4], 1

</llo_original>
